<compile_context>
chip_gen: v7x
topology: tpu7x:2x2x1
jax: 0.10.0
libtpu: 0.0.40
codegen_flags: <defaults>
</compile_context>

<pallas_src>
import functools
import math

import jax
import jax.numpy as jnp
from jax.experimental import pallas as pl
from jax.experimental.pallas import tpu as pltpu


def _round_up(x, m):
    return (x + m - 1) // m * m


def _sdp_dropout_kernel(x_ref, q_ref, v_ref, u_ref, o_ref, *,
                        scale, dropout_p, training):
    x = x_ref[...]              # (TILE_N, Dp) f32
    q = q_ref[...]              # (2, Dp)      f32 (resident across grid)
    v = v_ref[...]              # (2, Dp)      f32 (resident across grid)

    # Attention scores: s[:, j] = scale * sum_d x[:, d] * q[j, d]   (K tiny -> VPU)
    s0 = jnp.sum(x * q[0:1, :], axis=-1, keepdims=True) * scale    # (TILE_N, 1)
    s1 = jnp.sum(x * q[1:2, :], axis=-1, keepdims=True) * scale    # (TILE_N, 1)

    # Numerically stable 2-way softmax over the attention width.
    m = jnp.maximum(s0, s1)
    e0 = jnp.exp(s0 - m)
    e1 = jnp.exp(s1 - m)
    # TODO(synk): on real TPU, pl.reciprocal(e0 + e1, approx=True) would push
    # this divide onto the otherwise-idle EUP slot; plain divide kept here so
    # the kernel also runs under the CPU interpret harness.
    inv_den = 1.0 / (e0 + e1)
    w0 = e0 * inv_den
    w1 = e1 * inv_den

    if training and dropout_p > 0.0:
        u = u_ref[...]                                   # (TILE_N, 2) uniforms in [0, 1)
        inv_keep = 1.0 / (1.0 - dropout_p)               # static Python constant
        keep0 = u[:, 0:1] >= jnp.float32(dropout_p)
        keep1 = u[:, 1:2] >= jnp.float32(dropout_p)
        w0 = jnp.where(keep0, w0 * inv_keep, 0.0)
        w1 = jnp.where(keep1, w1 * inv_keep, 0.0)

    # z = w @ v with K=2 -> VPU broadcast-MAC; output stays lane-dense (Dp).
    o_ref[...] = w0 * v[0:1, :] + w1 * v[1:2, :]


def model_forward(inputs, q, v, dropout_key, *, dropout_p=0.5, training=True):
    n, d = inputs.shape
    assert q.shape == (2, d) and v.shape == (2, d)

    # Guard p == 1.0 (would divide by zero; torch returns all zeros).
    if training and dropout_p >= 1.0:
        return jnp.zeros((n, d), jnp.float32)

    scale = 1.0 / math.sqrt(d)          # sqrt of the *original* q.shape[-1]

    tile_n = min(512, _round_up(n, 8))  # big tiles when N is large, 8 for tiny N
    n_pad = _round_up(n, tile_n)
    d_pad = _round_up(d, 128)           # lane-dense last dim

    x_p = jnp.zeros((n_pad, d_pad), jnp.float32).at[:n, :d].set(
        inputs.astype(jnp.float32))
    q_p = jnp.zeros((2, d_pad), jnp.float32).at[:, :d].set(q.astype(jnp.float32))
    v_p = jnp.zeros((2, d_pad), jnp.float32).at[:, :d].set(v.astype(jnp.float32))

    # Dropout uniforms generated in the wrapper; tiled by BlockSpec so each
    # grid block sees distinct randoms (no per-block seed reuse).
    u = jax.random.uniform(dropout_key, (n_pad, 2), dtype=jnp.float32)

    kernel = functools.partial(
        _sdp_dropout_kernel,
        scale=scale, dropout_p=float(dropout_p), training=bool(training))

    z_p = pl.pallas_call(
        kernel,
        out_shape=jax.ShapeDtypeStruct((n_pad, d_pad), jnp.float32),
        grid=(n_pad // tile_n,),
        in_specs=[
            pl.BlockSpec((tile_n, d_pad), lambda i: (i, 0)),  # inputs, row-tiled
            pl.BlockSpec((2, d_pad), lambda i: (0, 0)),       # q, resident
            pl.BlockSpec((2, d_pad), lambda i: (0, 0)),       # v, resident
            pl.BlockSpec((tile_n, 2), lambda i: (i, 0)),      # dropout uniforms
        ],
        out_specs=pl.BlockSpec((tile_n, d_pad), lambda i: (i, 0)),
        compiler_params=pltpu.CompilerParams(
            dimension_semantics=("parallel",),   # v7x: shard rows over 2 TCs
            vmem_limit_bytes=64 << 20,
        ),
    )(x_p, q_p, v_p, u)

    return z_p[:n, :d]


if __name__ == "__main__":
    D = 3  # matches inputs.shape[-1] in the reference script

    # Fixed "inputs" tensor from the reference script.
    x = jnp.array([[1.0, 2.0, 3.0], [4.0, 5.0, 6.0]], dtype=jnp.float32)

    # Deterministic parameter init mimicking torch.rand (uniform [0, 1)).
    key = jax.random.PRNGKey(0)
    kq, kk, kv, kdrop = jax.random.split(key, 4)
    q = jax.random.uniform(kq, (2, D), dtype=jnp.float32)
    k = jax.random.uniform(kk, (2, D), dtype=jnp.float32)  # unused in forward (as in PyTorch)
    v = jax.random.uniform(kv, (2, D), dtype=jnp.float32)

    z = model_forward(x, q, v, kdrop, dropout_p=0.5, training=True)
    jax.block_until_ready(z)
    assert z.shape == (2, D) and z.dtype == jnp.float32
    assert bool(jnp.all(jnp.isfinite(z)))
    print("KERNEL_OK")
</pallas_src>

<mosaic_0001>
module attributes {stable_mosaic.version = 11 : i64} {
  func.func @_sdp_dropout_kernel(%arg0: i32, %arg1: memref<8x128xf32, #tpu.memory_space<vmem>>, %arg2: memref<2x128xf32, #tpu.memory_space<vmem>>, %arg3: memref<2x128xf32, #tpu.memory_space<vmem>>, %arg4: memref<8x2xf32, #tpu.memory_space<vmem>>, %arg5: memref<8x128xf32, #tpu.memory_space<vmem>>) attributes {dimension_semantics = [#tpu.dimension_semantics<parallel>], iteration_bounds = array<i64: 1>, scalar_prefetch = 0 : i64, scratch_operands = 0 : i64, tpu.core_type = #tpu.core_type<tc>, window_params = [{transform_indices = @transform_0, window_bounds = array<i64: 8, 128>}, {pipeline_mode = #tpu.pipeline_mode<synchronous>, transform_indices = @transform_1, window_bounds = array<i64: 2, 128>}, {pipeline_mode = #tpu.pipeline_mode<synchronous>, transform_indices = @transform_2, window_bounds = array<i64: 2, 128>}, {transform_indices = @transform_3, window_bounds = array<i64: 8, 2>}, {transform_indices = @transform_4, window_bounds = array<i64: 8, 128>}]} {
    %c0 = arith.constant 0 : index
    %c0_0 = arith.constant 0 : index
    %0 = vector.load %arg1[%c0, %c0_0] : memref<8x128xf32, #tpu.memory_space<vmem>>, vector<8x128xf32>
    %c0_1 = arith.constant 0 : index
    %c0_2 = arith.constant 0 : index
    %1 = vector.load %arg2[%c0_1, %c0_2] : memref<2x128xf32, #tpu.memory_space<vmem>>, vector<2x128xf32>
    %c0_3 = arith.constant 0 : index
    %c0_4 = arith.constant 0 : index
    %2 = vector.load %arg3[%c0_3, %c0_4] : memref<2x128xf32, #tpu.memory_space<vmem>>, vector<2x128xf32>
    %3 = vector.extract_strided_slice %1 {offsets = [0, 0], sizes = [1, 128], strides = [1, 1]} : vector<2x128xf32> to vector<1x128xf32>
    %4 = vector.broadcast %3 : vector<1x128xf32> to vector<8x128xf32>
    %5 = arith.mulf %0, %4 : vector<8x128xf32>
    %cst = arith.constant dense<0.000000e+00> : vector<8xf32>
    %6 = vector.multi_reduction <add>, %5, %cst [1] : vector<8x128xf32> to vector<8xf32>
    %7 = vector.shape_cast %6 : vector<8xf32> to vector<8x1xf32>
    %cst_5 = arith.constant 0.577350259 : f32
    %8 = vector.broadcast %cst_5 : f32 to vector<8x1xf32>
    %9 = arith.mulf %7, %8 : vector<8x1xf32>
    %10 = vector.extract_strided_slice %1 {offsets = [1, 0], sizes = [1, 128], strides = [1, 1]} : vector<2x128xf32> to vector<1x128xf32>
    %11 = vector.broadcast %10 : vector<1x128xf32> to vector<8x128xf32>
    %12 = arith.mulf %0, %11 : vector<8x128xf32>
    %cst_6 = arith.constant dense<0.000000e+00> : vector<8xf32>
    %13 = vector.multi_reduction <add>, %12, %cst_6 [1] : vector<8x128xf32> to vector<8xf32>
    %14 = vector.shape_cast %13 : vector<8xf32> to vector<8x1xf32>
    %cst_7 = arith.constant 0.577350259 : f32
    %15 = vector.broadcast %cst_7 : f32 to vector<8x1xf32>
    %16 = arith.mulf %14, %15 : vector<8x1xf32>
    %17 = arith.maximumf %9, %16 : vector<8x1xf32>
    %18 = arith.subf %9, %17 : vector<8x1xf32>
    %19 = math.exp %18 : vector<8x1xf32>
    %20 = arith.subf %16, %17 : vector<8x1xf32>
    %21 = math.exp %20 : vector<8x1xf32>
    %22 = arith.addf %19, %21 : vector<8x1xf32>
    %cst_8 = arith.constant 1.000000e+00 : f32
    %23 = vector.broadcast %cst_8 : f32 to vector<8x1xf32>
    %24 = arith.divf %23, %22 : vector<8x1xf32>
    %25 = arith.mulf %19, %24 : vector<8x1xf32>
    %26 = arith.mulf %21, %24 : vector<8x1xf32>
    %c0_9 = arith.constant 0 : index
    %c0_10 = arith.constant 0 : index
    %27 = vector.load %arg4[%c0_9, %c0_10] : memref<8x2xf32, #tpu.memory_space<vmem>>, vector<8x2xf32>
    %28 = vector.extract_strided_slice %27 {offsets = [0, 0], sizes = [8, 1], strides = [1, 1]} : vector<8x2xf32> to vector<8x1xf32>
    %cst_11 = arith.constant 5.000000e-01 : f32
    %29 = vector.broadcast %cst_11 : f32 to vector<8x1xf32>
    %30 = arith.cmpf oge, %28, %29 : vector<8x1xf32>
    %31 = vector.extract_strided_slice %27 {offsets = [0, 1], sizes = [8, 1], strides = [1, 1]} : vector<8x2xf32> to vector<8x1xf32>
    %cst_12 = arith.constant 5.000000e-01 : f32
    %32 = vector.broadcast %cst_12 : f32 to vector<8x1xf32>
    %33 = arith.cmpf oge, %31, %32 : vector<8x1xf32>
    %cst_13 = arith.constant 2.000000e+00 : f32
    %34 = vector.broadcast %cst_13 : f32 to vector<8x1xf32>
    %35 = arith.mulf %25, %34 : vector<8x1xf32>
    %cst_14 = arith.constant 0.000000e+00 : f32
    %36 = vector.broadcast %cst_14 : f32 to vector<8x1xf32>
    %37 = arith.select %30, %35, %36 : vector<8x1xi1>, vector<8x1xf32>
    %cst_15 = arith.constant 2.000000e+00 : f32
    %38 = vector.broadcast %cst_15 : f32 to vector<8x1xf32>
    %39 = arith.mulf %26, %38 : vector<8x1xf32>
    %cst_16 = arith.constant 0.000000e+00 : f32
    %40 = vector.broadcast %cst_16 : f32 to vector<8x1xf32>
    %41 = arith.select %33, %39, %40 : vector<8x1xi1>, vector<8x1xf32>
    %42 = vector.extract_strided_slice %2 {offsets = [0, 0], sizes = [1, 128], strides = [1, 1]} : vector<2x128xf32> to vector<1x128xf32>
    %43 = vector.broadcast %37 : vector<8x1xf32> to vector<8x128xf32>
    %44 = vector.broadcast %42 : vector<1x128xf32> to vector<8x128xf32>
    %45 = arith.mulf %43, %44 : vector<8x128xf32>
    %46 = vector.extract_strided_slice %2 {offsets = [1, 0], sizes = [1, 128], strides = [1, 1]} : vector<2x128xf32> to vector<1x128xf32>
    %47 = vector.broadcast %41 : vector<8x1xf32> to vector<8x128xf32>
    %48 = vector.broadcast %46 : vector<1x128xf32> to vector<8x128xf32>
    %49 = arith.mulf %47, %48 : vector<8x128xf32>
    %50 = arith.addf %45, %49 : vector<8x128xf32>
    %c0_17 = arith.constant 0 : index
    %c0_18 = arith.constant 0 : index
    %51 = vector.load %arg5[%c0_17, %c0_18] : memref<8x128xf32, #tpu.memory_space<vmem>>, vector<8x128xf32>
    tpu.vector_store %arg5[%c0_17, %c0_18], %50 {strides = array<i32>} : memref<8x128xf32, #tpu.memory_space<vmem>>, vector<8x128xf32>,
    return
  }
  func.func @transform_0(%arg0: i32) -> (i32, i32) {
    %c0_i32 = arith.constant 0 : i32
    %c0_i32_0 = arith.constant 0 : i32
    return %arg0, %c0_i32 : i32, i32
  }
  func.func @transform_1(%arg0: i32) -> (i32, i32) {
    %c0_i32 = arith.constant 0 : i32
    %c0_i32_0 = arith.constant 0 : i32
    %c0_i32_1 = arith.constant 0 : i32
    return %c0_i32, %c0_i32_0 : i32, i32
  }
  func.func @transform_2(%arg0: i32) -> (i32, i32) {
    %c0_i32 = arith.constant 0 : i32
    %c0_i32_0 = arith.constant 0 : i32
    %c0_i32_1 = arith.constant 0 : i32
    return %c0_i32, %c0_i32_0 : i32, i32
  }
  func.func @transform_3(%arg0: i32) -> (i32, i32) {
    %c0_i32 = arith.constant 0 : i32
    %c0_i32_0 = arith.constant 0 : i32
    return %arg0, %c0_i32 : i32, i32
  }
  func.func @transform_4(%arg0: i32) -> (i32, i32) {
    %c0_i32 = arith.constant 0 : i32
    %c0_i32_0 = arith.constant 0 : i32
    return %arg0, %c0_i32 : i32, i32
  }
}

</mosaic_0001>

<llo_original>
// kernel: tpu_custom_call.1
$region0: #{tpu_custom_call.1}
  #allocation0 [shape = 'u32[]', space=smem, size = 0x4, offset = 0x4, fixed_abs, tag = 'smem constant byte address 0x4 - core index']
  #allocation1 [shape = 'u32[144,128]{1,0:T(1,128)}', space=vmem, size = 0x12000, scoped, tag = 'internal scratch']
  %s0 = inlined_call_operand.hbm [shape: f32[8,128], index: 0, kind: input, shape index: {}]
  %s1 = inlined_call_operand.hbm [shape: f32[2,128], index: 1, kind: input, shape index: {}]
  %s2 = inlined_call_operand.hbm [shape: f32[2,128], index: 2, kind: input, shape index: {}]
  %s3 = inlined_call_operand.hbm [shape: f32[8,2], index: 3, kind: input, shape index: {}]
  %s4 = inlined_call_operand.hbm [shape: f32[8,128], index: 4, kind: output, shape index: {}]
  %s5 = sld [smem:[#allocation0]]
  $region42: #{tpu_custom_call.1} parent=0
    _
  %s7 = ssub.s32 1, %s5
  %s8 = scalar_select 0, %s7, %s5
  $region1: #{tpu_custom_call.1} parent=0
    #allocation2 [shape = 'u8[4096]{0}', space=vmem, size = 0x1000, scoped, tag = 'input window, operand 0, single buffered']
    #allocation3 [shape = 's32[1]{0}', space=sflag, size = 0x4, scoped, tag = 'scoped memory for tpu_custom_call.1']
    #allocation4 [shape = 's32[1]{0}', space=sflag, size = 0x4, scoped, tag = 'scoped memory for tpu_custom_call.1']
    #allocation5 [shape = 'u8[1024]{0}', space=vmem, size = 0x400, scoped, tag = 'input window, operand 1, single buffered']
    #allocation6 [shape = 's32[1]{0}', space=sflag, size = 0x4, scoped, tag = 'scoped memory for tpu_custom_call.1']
    #allocation7 [shape = 'u8[1024]{0}', space=vmem, size = 0x400, scoped, tag = 'input window, operand 2, single buffered']
    #allocation8 [shape = 'u8[4096]{0}', space=vmem, size = 0x1000, scoped, tag = 'input window, operand 3, single buffered']
    #allocation9 [shape = 's32[1]{0}', space=sflag, size = 0x4, scoped, tag = 'scoped memory for tpu_custom_call.1']
    #allocation10 [shape = 'u8[4096]{0}', space=vmem, size = 0x1000, scoped, tag = 'output window, operand 0, single buffered']
    %9 = vsyncpa [#allocation3], 0
    %10 = vsyncpa [#allocation6], 0
    %11 = vsyncpa [#allocation9], 0
    %12 = vsyncpa [#allocation4], 0
    // Predicated region
    $region2: #{tpu_custom_call.1} parent=1 // pred_check
      _
    $region3: #{tpu_custom_call.1} parent=1 // pred_check_branch
      %14 = sbr.rel (0) target = $region5
    $region4: #{tpu_custom_call.1} parent=1 // pred_region
      %s16 = ssub.s32 128, 128
      %17 = vsyncadd [#allocation3], %s16
      %s19 = sshll.u32 [#allocation2], 4
      %s20 = int_to_ptr.vmem [resolvable:$true] %s19
      %22 = dma.hbm_to_vmem [thread:$0]  %s0, 128, %s20, [#allocation3]
    $region5: #{tpu_custom_call.1} parent=1 // pred_fallthru
      _
    // Predicated region
    $region6: #{tpu_custom_call.1} parent=1 // pred_check
      _
    $region7: #{tpu_custom_call.1} parent=1 // pred_check_branch
      %24 = sbr.rel (0) target = $region9
    $region8: #{tpu_custom_call.1} parent=1 // pred_region
      %s26 = ssub.s32 32, 32
      %27 = vsyncadd [#allocation6], %s26
      %s29 = sshll.u32 [#allocation5], 4
      %s30 = int_to_ptr.vmem [resolvable:$true] %s29
      %32 = dma.hbm_to_vmem [thread:$0]  %s1, 32, %s30, [#allocation6]
    $region9: #{tpu_custom_call.1} parent=1 // pred_fallthru
      _
    // Predicated region
    $region10: #{tpu_custom_call.1} parent=1 // pred_check
      _
    $region11: #{tpu_custom_call.1} parent=1 // pred_check_branch
      %34 = sbr.rel (0) target = $region13
    $region12: #{tpu_custom_call.1} parent=1 // pred_region
      %s36 = ssub.s32 32, 32
      %37 = vsyncadd [#allocation6], %s36
      %s39 = sshll.u32 [#allocation7], 4
      %s40 = int_to_ptr.vmem [resolvable:$true] %s39
      %42 = dma.hbm_to_vmem [thread:$0]  %s2, 32, %s40, [#allocation6]
    $region13: #{tpu_custom_call.1} parent=1 // pred_fallthru
      _
    // Predicated region
    $region14: #{tpu_custom_call.1} parent=1 // pred_check
      _
    $region15: #{tpu_custom_call.1} parent=1 // pred_check_branch
      %44 = sbr.rel (0) target = $region17
    $region16: #{tpu_custom_call.1} parent=1 // pred_region
      %s46 = ssub.s32 128, 128
      %47 = vsyncadd [#allocation9], %s46
      %s49 = sshll.u32 [#allocation8], 4
      %s50 = int_to_ptr.vmem [resolvable:$true] %s49
      %52 = dma.hbm_to_vmem [thread:$0]  %s3, 128, %s50, [#allocation9]
    $region17: #{tpu_custom_call.1} parent=1 // pred_fallthru
      _
    // Predicated region
    $region18: #{tpu_custom_call.1} parent=1 // pred_check
      _
    $region19: #{tpu_custom_call.1} parent=1 // pred_check_branch
      %54 = sbr.rel (0) target = $region21
    $region20: #{tpu_custom_call.1} parent=1 // pred_region
      %55 = dma.done [#allocation3], 128
    $region21: #{tpu_custom_call.1} parent=1 // pred_fallthru
      _
    // Predicated region
    $region22: #{tpu_custom_call.1} parent=1 // pred_check
      _
    $region23: #{tpu_custom_call.1} parent=1 // pred_check_branch
      %57 = sbr.rel (0) target = $region25
    $region24: #{tpu_custom_call.1} parent=1 // pred_region
      %58 = dma.done [#allocation6], 32
    $region25: #{tpu_custom_call.1} parent=1 // pred_fallthru
      _
    // Predicated region
    $region26: #{tpu_custom_call.1} parent=1 // pred_check
      _
    $region27: #{tpu_custom_call.1} parent=1 // pred_check_branch
      %60 = sbr.rel (0) target = $region29
    $region28: #{tpu_custom_call.1} parent=1 // pred_region
      %61 = dma.done [#allocation6], 32
    $region29: #{tpu_custom_call.1} parent=1 // pred_fallthru
      _
    // Predicated region
    $region30: #{tpu_custom_call.1} parent=1 // pred_check
      _
    $region31: #{tpu_custom_call.1} parent=1 // pred_check_branch
      %63 = sbr.rel (0) target = $region33
    $region32: #{tpu_custom_call.1} parent=1 // pred_region
      %64 = dma.done [#allocation9], 128
    $region33: #{tpu_custom_call.1} parent=1 // pred_fallthru
      _
    %v65 = vld [vmem:[#allocation2] sm:$0xff]
    %v66 = vld [vmem:[#allocation5] sm:$0x3]
    %v67 = vld [vmem:[#allocation7] sm:$0x3]
    %v68 = vlaneseq
    %v69 = vshrl.u32 %v68, 7
    %v70 = vsub.s32 0, %v69
    %v71 = vrot.slane %v66, %v70
    %v72 = vmul.f32 %v65, %v71
    %73 = vadd.xlane.f32.xlu0 %v72
    %v74 = vpop.xlane.xlu0 %73
    %v75 = vmul.f32 %v74, 0.57735026
    %v76 = vlaneseq
    %v77 = vshrl.u32 %v76, 7
    %v78 = vsub.s32 1, %v77
    %v79 = vrot.slane %v66, %v78
    %v80 = vmul.f32 %v65, %v79
    %81 = vadd.xlane.f32.xlu0 %v80
    %v82 = vpop.xlane.xlu0 %81
    %v83 = vmul.f32 %v82, 0.57735026
    %v84 = vmax.f32 %v75, %v83
    %v85 = vsub.f32 %v75, %v84
    %v86 = vmul.f32 %v85, 1.442695
    %v87 = vpow.pop %v86
    %v88 = vsub.f32 %v83, %v84
    %v89 = vmul.f32 %v88, 1.442695
    %v90 = vpow.pop %v89
    %v91 = vadd.f32 %v87, %v90
    %v92 = vrcp.pop %v91
    %v93 = vmul.f32 1.0, %v92
    %v94 = vmul.f32 %v87, %v93
    %v95 = vmul.f32 %v90, %v93
    %v96 = vld [vmem:[#allocation8] sm:$0xff]
    %vm97 = vcmp.ge.f32.partialorder %v96, 0.5
    %v98 = vmul.f32 %v94, 2.0
    %v99 = vsel %vm97, %v98, 0.0
    %v100 = vmul.f32 %v95, 2.0
    %v101 = vsel %vm97, %v100, 0.0
    %103 = vset.pattern.permute.xlu0 0
    %104 = vperm.xlu0 %103, %v99
    %v105 = vpop.permute.xlu0 %104
    %v107 = vlaneseq
    %v108 = vshrl.u32 %v107, 7
    %v109 = vsub.s32 0, %v108
    %v110 = vrot.slane %v67, %v109
    %v111 = vmul.f32 %v105, %v110
    %113 = vset.pattern.permute.xlu0 1
    %114 = vperm.xlu0 %113, %v101
    %v115 = vpop.permute.xlu0 %114
    %v117 = vlaneseq
    %v118 = vshrl.u32 %v117, 7
    %v119 = vsub.s32 1, %v118
    %v120 = vrot.slane %v67, %v119
    %v121 = vmul.f32 %v115, %v120
    %v122 = vadd.f32 %v111, %v121
    %123 = vst [vmem:[#allocation10] sm:$0xff] %v122
    // Predicated region
    $region34: #{tpu_custom_call.1} parent=1 // pred_check
      _
    $region35: #{tpu_custom_call.1} parent=1 // pred_check_branch
      %125 = sbr.rel (0) target = $region37
    $region36: #{tpu_custom_call.1} parent=1 // pred_region
      %s127 = ssub.s32 128, 128
      %128 = vsyncadd [#allocation4], %s127
      %s130 = sshll.u32 [#allocation10], 4
      %s131 = int_to_ptr.vmem [resolvable:$true] %s130
      %133 = dma.vmem_to_hbm [thread:$0]  %s131, 128, %s4, [#allocation4]
    $region37: #{tpu_custom_call.1} parent=1 // pred_fallthru
      _
    // Predicated region
    $region38: #{tpu_custom_call.1} parent=1 // pred_check
      _
    $region39: #{tpu_custom_call.1} parent=1 // pred_check_branch
      %135 = sbr.rel (0) target = $region41
    $region40: #{tpu_custom_call.1} parent=1 // pred_region
      %136 = dma.done [#allocation4], 128
    $region41: #{tpu_custom_call.1} parent=1 // pred_fallthru
      _
    %137 = vsyncpa [#allocation3], 1
    %138 = vsyncpa [#allocation6], 1
    %139 = vsyncpa [#allocation9], 1
    %140 = vsyncpa [#allocation4], 1

</llo_original>
